<compile_context>
chip_gen: v5e
topology: v5e:2x2
jax: 0.10.0
libtpu: 0.0.40
codegen_flags: <defaults>
</compile_context>

<pallas_src>
import functools
import math

import jax
import jax.numpy as jnp
from jax.experimental import pallas as pl
from jax.experimental.pallas import tpu as pltpu

LANES = 128
SUBLANES = 8
FOLD_WAYS = 4                        # ILP width of the in-block sublane fold
ROW_GRANULE = FOLD_WAYS * SUBLANES   # 32: also covers bf16(16)/int8(32) packing
MAX_ROW_BLOCK = 8192                 # 8192 x 128 f32 = 4 MiB per block

_SINGLE_TC_KINDS = ("v2", "v3", "v5 lite", "v5e", "v5litepod", "v6 lite", "v6e")


def _round_up(x, m):
    return (x + m - 1) // m * m


def _num_partials():
    """Leading 'parallel' grid extent: 2 on multi-TensorCore chips (v4/v5p/v7x),
    1 on single-TC chips so divisible shapes keep unmasked codegen."""
    try:
        kind = jax.devices()[0].device_kind.lower()
    except Exception:
        return 2
    return 1 if any(s in kind for s in _SINGLE_TC_KINDS) else 2


def _vmem_limit_bytes():
    """~3/4 of physical VMEM so 4 MiB blocks + 3-deep input buffering + the
    full-block elementwise temporaries fit comfortably on every chip."""
    try:
        cap = int(pltpu.get_tpu_info().vmem_capacity_bytes)
        return max(32 << 20, min((cap // 4) * 3, 96 << 20))
    except Exception:
        return None


def _elem_sum_term(x, *, clamp_alpha, force_opaque, fused_floor):
    """Per-element term accumulated by the kernel.

    For force_opaque the sign (-log x) is folded into the final scale, so this
    returns +log(clip(x)).  For the standard loss, when fused_floor is set the
    clip/log/log/max chain is fused exactly into log(max(x*(1-x), e^-clamp))."""
    x = x.astype(jnp.float32)
    if force_opaque:
        return jnp.log(jnp.clip(x, 0.01, 0.99))
    if fused_floor is not None:
        # Exact iff clamp_alpha <= -log(0.01*0.99); the max also guards the log
        # argument for x <= 0 / x >= 1, so no NaN/-inf from out-of-range inputs.
        return jnp.log(jnp.maximum(x * (1.0 - x), fused_floor))
    x = jnp.clip(x, 0.01, 0.99)
    return jnp.maximum(jnp.log(x * (1.0 - x)), -clamp_alpha)


def _alpha_sum_kernel(x_ref, o_ref, *, clamp_alpha, force_opaque, fused_floor,
                      rows, row_block, n_full_blocks, needs_mask):
    p = pl.program_id(0)            # partial-sum ("parallel") index
    k = pl.program_id(1)            # reduction step
    steps = pl.num_programs(1)

    @pl.when(k == 0)
    def _():
        o_ref[...] = jnp.zeros_like(o_ref)

    val = _elem_sum_term(x_ref[...], clamp_alpha=clamp_alpha,
                         force_opaque=force_opaque, fused_floor=fused_floor)

    def fold(v):
        # (row_block,128) -> (8,128): first reduce to (32,128) = 4 vregs so the
        # accumulation has 4 independent VALU chains; reshapes preserve the
        # (8,128) tiling, so they are free views.
        g = row_block // ROW_GRANULE
        v = v.reshape(g, ROW_GRANULE, LANES).sum(axis=0)            # (32, 128)
        return v.reshape(FOLD_WAYS, SUBLANES, LANES).sum(axis=0)    # (8, 128)

    if needs_mask:
        gb = p * steps + k          # global row-block index (small, int32-safe)

        @pl.when(gb < n_full_blocks)
        def _():
            o_ref[...] += fold(val)[None]

        @pl.when(gb >= n_full_blocks)
        def _():
            # Partial (or fully out-of-range padding) block: zero rows >= rows.
            limit = rows - gb * row_block          # local row limit, no overflow
            rr = jax.lax.broadcasted_iota(jnp.int32, val.shape, 0)
            o_ref[...] += fold(jnp.where(rr < limit, val, 0.0))[None]
    else:
        o_ref[...] += fold(val)[None]


def alpha_loss_nv2(alpha_fine, *, lambda_alpha, clamp_alpha, init_epoch, epoch,
                   force_opaque=False, row_block=None):
    """Forward pass matching AlphaLossNV2.forward.

    Returns a 0-d scalar when the loss is active and zeros((1,)) (matching
    `torch.zeros(1)`) when inactive — same as the PyTorch module.
    """
    # TODO(synk): the epoch buffer / sched_step state is host-side Python here
    # (same gating semantics as the module, but it forces a retrace on change).
    if not (lambda_alpha > 0.0 and epoch >= init_epoch):
        return jnp.zeros((1,), dtype=jnp.float32)

    clamp_alpha = float(clamp_alpha)
    force_opaque = bool(force_opaque)
    fused_floor = (math.exp(-clamp_alpha)
                   if (not force_opaque and clamp_alpha <= -math.log(0.01 * 0.99))
                   else None)

    n = int(alpha_fine.size)
    flat = alpha_fine.reshape(-1)            # contiguous view, no HBM copy
    rows = n // LANES
    tail_len = n - rows * LANES

    tail_sum = jnp.float32(0.0)
    if tail_len:
        # Ragged tail (<128 elems) handled in plain JAX.
        # TODO(synk): when n % 128 != 0 the bulk prefix slice below materializes
        # an extra HBM copy (XLA has no copy-free 2-D view of a ragged prefix);
        # the common image-sized case (n % 128 == 0) stays copy-free.
        tail_sum = jnp.sum(_elem_sum_term(
            flat[rows * LANES:], clamp_alpha=clamp_alpha,
            force_opaque=force_opaque, fused_floor=fused_floor))

    if rows == 0:
        total = tail_sum
    else:
        bulk = flat[:rows * LANES] if tail_len else flat
        x2d = bulk.reshape(rows, LANES)      # free bitcast for contiguous bulk

        if row_block is None:
            row_block = MAX_ROW_BLOCK
        row_block = max(ROW_GRANULE,
                        min(_round_up(row_block, ROW_GRANULE),
                            _round_up(rows, ROW_GRANULE)))

        n_blocks = pl.cdiv(rows, row_block)
        num_partials = max(1, min(_num_partials(), n_blocks))
        steps = pl.cdiv(n_blocks, num_partials)
        n_full_blocks = rows // row_block
        needs_mask = (num_partials * steps) != n_full_blocks

        kernel = functools.partial(
            _alpha_sum_kernel,
            clamp_alpha=clamp_alpha,
            force_opaque=force_opaque,
            fused_floor=fused_floor,
            rows=rows,
            row_block=row_block,
            n_full_blocks=n_full_blocks,
            needs_mask=needs_mask,
        )

        def in_map(p, k):
            # Clamp so padding grid steps re-read a valid block (masked to 0).
            return (jnp.minimum(p * steps + k, n_blocks - 1), 0)

        try:
            cost = pl.CostEstimate(
                flops=6 * rows * LANES,
                transcendentals=rows * LANES,
                bytes_accessed=rows * LANES * x2d.dtype.itemsize
                + num_partials * SUBLANES * LANES * 4)
        except Exception:
            cost = None

        def run(pipeline_mode):
            spec_kwargs = {} if pipeline_mode is None else {"pipeline_mode": pipeline_mode}
            in_spec = pl.BlockSpec((row_block, LANES), in_map, **spec_kwargs)
            return pl.pallas_call(
                kernel,
                out_shape=jax.ShapeDtypeStruct(
                    (num_partials, SUBLANES, LANES), jnp.float32),
                grid_spec=pltpu.PrefetchScalarGridSpec(
                    num_scalar_prefetch=0,
                    grid=(num_partials, steps),
                    in_specs=[in_spec],
                    out_specs=pl.BlockSpec((1, SUBLANES, LANES),
                                           lambda p, k: (p, 0, 0)),
                ),
                compiler_params=pltpu.CompilerParams(
                    dimension_semantics=("parallel", "arbitrary"),
                    vmem_limit_bytes=_vmem_limit_bytes()),
                cost_estimate=cost,
            )(x2d)

        try:
            partials = run(pl.Buffered(3))   # 3-deep input buffering (v7x DMA queue)
        except Exception:
            partials = run(None)             # fallback: default double-buffering

        total = jnp.sum(partials) + tail_sum

    sign = -1.0 if force_opaque else 1.0     # force_opaque negation folded here
    return jnp.float32(sign * lambda_alpha) * total / jnp.float32(n)


def _reference(alpha_fine, *, lambda_alpha, clamp_alpha, init_epoch, epoch,
               force_opaque=False):
    if not (lambda_alpha > 0.0 and epoch >= init_epoch):
        return jnp.zeros((1,), dtype=jnp.float32)
    a = jnp.clip(alpha_fine.astype(jnp.float32), 0.01, 0.99)
    if force_opaque:
        return lambda_alpha * jnp.mean(-jnp.log(a))
    loss = jnp.log(a) + jnp.log(1.0 - a)
    loss = jnp.maximum(loss, -clamp_alpha)
    return lambda_alpha * jnp.mean(loss)


if __name__ == "__main__":
    key = jax.random.PRNGKey(0)
    # alpha values in (0, 1), NCHW-shaped like a per-pixel alpha map.
    x = jax.random.uniform(key, (2, 4, 16, 16), dtype=jnp.float32,
                           minval=0.0, maxval=1.0)

    cfg = dict(lambda_alpha=0.1, clamp_alpha=3.0, init_epoch=0, epoch=1)

    # Active branch, standard loss (fused clip-free path since clamp_alpha=3.0).
    out = alpha_loss_nv2(x, **cfg, force_opaque=False)
    jax.block_until_ready(out)
    ref = _reference(x, **cfg, force_opaque=False)
    assert jnp.allclose(out, ref, rtol=1e-5, atol=1e-6), (out, ref)

    # Active branch, force_opaque (BCE vs all-ones) path, negate folded into scale.
    out_fo = alpha_loss_nv2(x, **cfg, force_opaque=True)
    jax.block_until_ready(out_fo)
    ref_fo = _reference(x, **cfg, force_opaque=True)
    assert jnp.allclose(out_fo, ref_fo, rtol=1e-5, atol=1e-6), (out_fo, ref_fo)

    # Large clamp_alpha (> 4.615) exercises the exact clip fallback path.
    cfg_big = dict(lambda_alpha=0.1, clamp_alpha=10.0, init_epoch=0, epoch=1)
    out_c = alpha_loss_nv2(x, **cfg_big, force_opaque=False)
    jax.block_until_ready(out_c)
    ref_c = _reference(x, **cfg_big, force_opaque=False)
    assert jnp.allclose(out_c, ref_c, rtol=1e-5, atol=1e-6), (out_c, ref_c)

    # Multi-block path: explicit small row_block forces accumulation over k
    # plus a masked partial final block.
    key_m = jax.random.PRNGKey(2)
    xm = jax.random.uniform(key_m, (8, 4, 40, 40), dtype=jnp.float32,
                            minval=0.0, maxval=1.0)
    out_m = alpha_loss_nv2(xm, **cfg, force_opaque=False, row_block=256)
    jax.block_until_ready(out_m)
    ref_m = _reference(xm, **cfg, force_opaque=False)
    assert jnp.allclose(out_m, ref_m, rtol=1e-5, atol=1e-6), (out_m, ref_m)

    # Ragged shape (n % 128 != 0, partial row-block + <128-elem tail).
    key2 = jax.random.PRNGKey(1)
    xr = jax.random.uniform(key2, (3, 5, 7, 11), dtype=jnp.float32,
                            minval=0.0, maxval=1.0)
    out_r = alpha_loss_nv2(xr, **cfg, force_opaque=False)
    jax.block_until_ready(out_r)
    ref_r = _reference(xr, **cfg, force_opaque=False)
    assert jnp.allclose(out_r, ref_r, rtol=1e-5, atol=1e-6), (out_r, ref_r)

    # bf16 input: kernel reads bf16 (packed tiles) and upcasts per block.
    xb = x.astype(jnp.bfloat16)
    out_b = alpha_loss_nv2(xb, **cfg, force_opaque=False)
    jax.block_until_ready(out_b)
    ref_b = _reference(xb, **cfg, force_opaque=False)
    assert jnp.allclose(out_b, ref_b, rtol=1e-5, atol=1e-6), (out_b, ref_b)

    # Inactive branch (epoch < init_epoch) -> zeros(1), no kernel launch.
    out_off = alpha_loss_nv2(x, lambda_alpha=0.1, clamp_alpha=3.0,
                             init_epoch=5, epoch=0)
    jax.block_until_ready(out_off)
    assert out_off.shape == (1,) and float(out_off[0]) == 0.0

    print("KERNEL_OK")
</pallas_src>

<mosaic_0001>
module attributes {stable_mosaic.version = 11 : i64} {
  func.func @_alpha_sum_kernel(%arg0: i32, %arg1: i32, %arg2: memref<32x128xf32, #tpu.memory_space<vmem>>, %arg3: memref<1x8x128xf32, #tpu.memory_space<vmem>>) attributes {dimension_semantics = [#tpu.dimension_semantics<parallel>, #tpu.dimension_semantics<arbitrary>], iteration_bounds = array<i64: 1, 1>, scalar_prefetch = 0 : i64, scratch_operands = 0 : i64, tpu.core_type = #tpu.core_type<tc>, window_params = [{transform_indices = @transform_0, window_bounds = array<i64: 32, 128>}, {transform_indices = @transform_1, window_bounds = array<i64: 1, 8, 128>}]} {
    %c0_i32 = arith.constant 0 : i32
    %0 = arith.cmpi eq, %arg1, %c0_i32 : i32
    %1 = arith.extui %0 : i1 to i32
    %c0_i32_0 = arith.constant 0 : i32
    %2 = arith.cmpi ne, %1, %c0_i32_0 : i32
    scf.if %2 {
      %cst_7 = arith.constant 0.000000e+00 : f32
      %18 = vector.broadcast %cst_7 : f32 to vector<1x8x128xf32>
      %c0_8 = arith.constant 0 : index
      %c0_9 = arith.constant 0 : index
      %c0_10 = arith.constant 0 : index
      %19 = vector.load %arg3[%c0_8, %c0_9, %c0_10] : memref<1x8x128xf32, #tpu.memory_space<vmem>>, vector<1x8x128xf32>
      tpu.vector_store %arg3[%c0_8, %c0_9, %c0_10], %18 {strides = array<i32>} : memref<1x8x128xf32, #tpu.memory_space<vmem>>, vector<1x8x128xf32>,
    } else {
    }
    %c0 = arith.constant 0 : index
    %c0_1 = arith.constant 0 : index
    %3 = vector.load %arg2[%c0, %c0_1] : memref<32x128xf32, #tpu.memory_space<vmem>>, vector<32x128xf32>
    %cst = arith.constant 1.000000e+00 : f32
    %4 = vector.broadcast %cst : f32 to vector<32x128xf32>
    %5 = arith.subf %4, %3 : vector<32x128xf32>
    %6 = arith.mulf %3, %5 : vector<32x128xf32>
    %cst_2 = arith.constant 0.0497870669 : f32
    %7 = vector.broadcast %cst_2 : f32 to vector<32x128xf32>
    %8 = arith.maximumf %6, %7 : vector<32x128xf32>
    %9 = math.log %8 : vector<32x128xf32>
    %c1_i32 = arith.constant 1 : i32
    %10 = arith.muli %arg0, %c1_i32 : i32
    %11 = arith.addi %10, %arg1 : i32
    %c0_i32_3 = arith.constant 0 : i32
    %12 = arith.cmpi slt, %11, %c0_i32_3 : i32
    %13 = arith.extui %12 : i1 to i32
    %c0_i32_4 = arith.constant 0 : i32
    %14 = arith.cmpi ne, %13, %c0_i32_4 : i32
    scf.if %14 {
      %c0_7 = arith.constant 0 : index
      %c0_8 = arith.constant 0 : index
      %c0_9 = arith.constant 0 : index
      %18 = vector.load %arg3[%c0_7, %c0_8, %c0_9] : memref<1x8x128xf32, #tpu.memory_space<vmem>>, vector<1x8x128xf32>
      %19 = vector.shape_cast %9 : vector<32x128xf32> to vector<1x32x128xf32>
      %cst_10 = arith.constant dense<0.000000e+00> : vector<32x128xf32>
      %20 = vector.multi_reduction <add>, %19, %cst_10 [0] : vector<1x32x128xf32> to vector<32x128xf32>
      %21 = vector.shape_cast %20 : vector<32x128xf32> to vector<4x8x128xf32>
      %cst_11 = arith.constant dense<0.000000e+00> : vector<8x128xf32>
      %22 = vector.multi_reduction <add>, %21, %cst_11 [0] : vector<4x8x128xf32> to vector<8x128xf32>
      %23 = vector.shape_cast %22 : vector<8x128xf32> to vector<1x8x128xf32>
      %24 = arith.addf %18, %23 : vector<1x8x128xf32>
      %c0_12 = arith.constant 0 : index
      %c0_13 = arith.constant 0 : index
      %c0_14 = arith.constant 0 : index
      %25 = vector.load %arg3[%c0_12, %c0_13, %c0_14] : memref<1x8x128xf32, #tpu.memory_space<vmem>>, vector<1x8x128xf32>
      tpu.vector_store %arg3[%c0_12, %c0_13, %c0_14], %24 {strides = array<i32>} : memref<1x8x128xf32, #tpu.memory_space<vmem>>, vector<1x8x128xf32>,
    } else {
    }
    %c0_i32_5 = arith.constant 0 : i32
    %15 = arith.cmpi sge, %11, %c0_i32_5 : i32
    %16 = arith.extui %15 : i1 to i32
    %c0_i32_6 = arith.constant 0 : i32
    %17 = arith.cmpi ne, %16, %c0_i32_6 : i32
    scf.if %17 {
      %c32_i32 = arith.constant 32 : i32
      %18 = arith.muli %11, %c32_i32 : i32
      %c16_i32 = arith.constant 16 : i32
      %19 = arith.subi %c16_i32, %18 : i32
      %20 = tpu.iota {dimensions = array<i32: 0>} : vector<32x128xi32>
      %c0_7 = arith.constant 0 : index
      %c0_8 = arith.constant 0 : index
      %c0_9 = arith.constant 0 : index
      %21 = vector.load %arg3[%c0_7, %c0_8, %c0_9] : memref<1x8x128xf32, #tpu.memory_space<vmem>>, vector<1x8x128xf32>
      %22 = vector.broadcast %19 : i32 to vector<32x128xi32>
      %23 = arith.cmpi slt, %20, %22 : vector<32x128xi32>
      %cst_10 = arith.constant 0.000000e+00 : f32
      %24 = vector.broadcast %cst_10 : f32 to vector<32x128xf32>
      %25 = arith.select %23, %9, %24 : vector<32x128xi1>, vector<32x128xf32>
      %26 = vector.shape_cast %25 : vector<32x128xf32> to vector<1x32x128xf32>
      %cst_11 = arith.constant dense<0.000000e+00> : vector<32x128xf32>
      %27 = vector.multi_reduction <add>, %26, %cst_11 [0] : vector<1x32x128xf32> to vector<32x128xf32>
      %28 = vector.shape_cast %27 : vector<32x128xf32> to vector<4x8x128xf32>
      %cst_12 = arith.constant dense<0.000000e+00> : vector<8x128xf32>
      %29 = vector.multi_reduction <add>, %28, %cst_12 [0] : vector<4x8x128xf32> to vector<8x128xf32>
      %30 = vector.shape_cast %29 : vector<8x128xf32> to vector<1x8x128xf32>
      %31 = arith.addf %21, %30 : vector<1x8x128xf32>
      %c0_13 = arith.constant 0 : index
      %c0_14 = arith.constant 0 : index
      %c0_15 = arith.constant 0 : index
      %32 = vector.load %arg3[%c0_13, %c0_14, %c0_15] : memref<1x8x128xf32, #tpu.memory_space<vmem>>, vector<1x8x128xf32>
      tpu.vector_store %arg3[%c0_13, %c0_14, %c0_15], %31 {strides = array<i32>} : memref<1x8x128xf32, #tpu.memory_space<vmem>>, vector<1x8x128xf32>,
    } else {
    }
    return
  }
  func.func @transform_0(%arg0: i32, %arg1: i32) -> (i32, i32) {
    %c1_i32 = arith.constant 1 : i32
    %0 = arith.muli %arg0, %c1_i32 : i32
    %1 = arith.addi %0, %arg1 : i32
    %c0_i32 = arith.constant 0 : i32
    %2 = arith.minsi %1, %c0_i32 : i32
    %c0_i32_0 = arith.constant 0 : i32
    %c0_i32_1 = arith.constant 0 : i32
    return %2, %c0_i32_0 : i32, i32
  }
  func.func @transform_1(%arg0: i32, %arg1: i32) -> (i32, i32, i32) {
    %c0_i32 = arith.constant 0 : i32
    %c0_i32_0 = arith.constant 0 : i32
    %c0_i32_1 = arith.constant 0 : i32
    return %arg0, %c0_i32, %c0_i32_0 : i32, i32, i32
  }
}

</mosaic_0001>

<llo_original>
// kernel: tpu_custom_call.1
$region0: #{tpu_custom_call.1}
  #allocation0 [shape = 'u32[]', space=smem, size = 0x4, offset = 0x4, fixed_abs, tag = 'smem constant byte address 0x4 - core index']
  #allocation1 [shape = 'u32[72,128]{1,0:T(1,128)}', space=vmem, size = 0x9000, scoped, tag = 'internal scratch']
  %s0 = inlined_call_operand.hbm [shape: f32[16,128], index: 0, kind: input, shape index: {}]
  %s1 = inlined_call_operand.hbm [shape: f32[1,8,128], index: 1, kind: output, shape index: {}]
  %s2 = sld [smem:[#allocation0]]
  $region30: #{tpu_custom_call.1} parent=0
    _
  %s4 = ssub.s32 1, %s2
  %s5 = scalar_select 0, %s4, %s2
  $region1: #{tpu_custom_call.1} parent=0
    #allocation2 [shape = 'u8[16384]{0}', space=vmem, size = 0x4000, scoped, tag = 'input window, operand 0, single buffered']
    #allocation3 [shape = 's32[1]{0}', space=sflag, size = 0x4, scoped, tag = 'scoped memory for tpu_custom_call.1']
    #allocation4 [shape = 's32[1]{0}', space=sflag, size = 0x4, scoped, tag = 'scoped memory for tpu_custom_call.1']
    #allocation5 [shape = 'u8[4096]{0}', space=vmem, size = 0x1000, scoped, tag = 'output window, operand 0, single buffered']
    %6 = vsyncpa [#allocation3], 0
    %7 = vsyncpa [#allocation4], 0
    // Predicated region
    $region2: #{tpu_custom_call.1} parent=1 // pred_check
      _
    $region3: #{tpu_custom_call.1} parent=1 // pred_check_branch
      %9 = sbr.rel (0) target = $region5
    $region4: #{tpu_custom_call.1} parent=1 // pred_region
      %s10 = sadd.s32 0, 0
      %p11 = scmp.lt.s32.totalorder %s10, 0
      %s12 = scalar_select %p11, %s10, 0
      %s13 = smul.u32 4, %s12
      %s14 = ssub.s32 2, %s13
      %s15 = smul.u32 8, %s14
      %s16 = ssub.s32 32, %s15
      %s17 = sshll.u32 %s16, 4
      %18 = vsyncadd [#allocation3], %s17
      %p19 = scmp.ne.s32.totalorder 0, %s15
      %s20 = smul.addr %s13, 8
      %s21 = scalar_lea.hbm %s0, %s20
      %s22 = smul.u32 8, %s14
      %s23 = sshll.u32 %s21, 4
      %s24 = int_to_ptr.hbm [resolvable:$true] %s23
      %s25 = sshll.u32 [#allocation2], 4
      %s26 = int_to_ptr.vmem [resolvable:$true] %s25
      %s27 = sshll.u32 %s22, 4
      %31 = dma.hbm_to_vmem [thread:$0]  (%p19), %s24, %s27, %s26, [#allocation3], 128, 128, 8
    $region5: #{tpu_custom_call.1} parent=1 // pred_fallthru
      _
    // Predicated region
    $region6: #{tpu_custom_call.1} parent=1 // pred_check
      _
    $region7: #{tpu_custom_call.1} parent=1 // pred_check_branch
      %33 = sbr.rel (0) target = $region9
    $region8: #{tpu_custom_call.1} parent=1 // pred_region
      %35 = dma.done [#allocation3], 512
    $region9: #{tpu_custom_call.1} parent=1 // pred_fallthru
      _
    %s36 = sadd.s32 0, 0
    %p37 = scmp.lt.s32.totalorder %s36, 0
    %s38 = scalar_select %p37, %s36, 0
    %s39 = smul.u32 4, %s38
    %s40 = ssub.s32 2, %s39
    %s41 = smul.u32 8, %s40
    %p42 = scmp.eq.s32.totalorder 0, 0
    // Predicated region
    $region10: #{tpu_custom_call.1} parent=1 // pred_check
      %p43 = pneg %p42
    $region11: #{tpu_custom_call.1} parent=1 // pred_check_branch
      %45 = sbr.rel (%p43) target = $region13
    $region12: #{tpu_custom_call.1} parent=1 // pred_region
      %46 = vst [vmem:[#allocation5] sm:$0xff] 0.0
    $region13: #{tpu_custom_call.1} parent=1 // pred_fallthru
      _
    %v47 = vld [vmem:[#allocation2] sm:$0xff]
    %v48 = vld [vmem:[#allocation2 + $0x8] sm:$0xff]
    %v49 = vld [vmem:[#allocation2 + $0x10] sm:$0xff]
    %v50 = vld [vmem:[#allocation2 + $0x18] sm:$0xff]
    %v51 = vsub.f32 1.0, %v47
    %v52 = vsub.f32 1.0, %v48
    %v53 = vsub.f32 1.0, %v49
    %v54 = vsub.f32 1.0, %v50
    %v55 = vmul.f32 %v47, %v51
    %v56 = vmul.f32 %v48, %v52
    %v57 = vmul.f32 %v49, %v53
    %v58 = vmul.f32 %v50, %v54
    %v59 = vmax.f32 %v55, 0.049787067
    %v60 = vmax.f32 %v56, 0.049787067
    %v61 = vmax.f32 %v57, 0.049787067
    %v62 = vmax.f32 %v58, 0.049787067
    %v63 = vlog2.pop %v59
    %v64 = vmul.f32 %v63, 0.6931472
    %v65 = vlog2.pop %v60
    %v66 = vmul.f32 %v65, 0.6931472
    %v67 = vlog2.pop %v61
    %v68 = vmul.f32 %v67, 0.6931472
    %v69 = vlog2.pop %v62
    %v70 = vmul.f32 %v69, 0.6931472
    %s71 = sadd.s32 0, 0
    %p72 = scmp.lt.s32.totalorder %s71, 0
    // Predicated region
    $region14: #{tpu_custom_call.1} parent=1 // pred_check
      %p73 = pneg %p72
    $region15: #{tpu_custom_call.1} parent=1 // pred_check_branch
      %75 = sbr.rel (%p73) target = $region17
    $region16: #{tpu_custom_call.1} parent=1 // pred_region
      %v76 = vld [vmem:[#allocation5] sm:$0xff]
      %v77 = vadd.f32 %v64, 0.0
      %v78 = vadd.f32 %v66, 0.0
      %v79 = vadd.f32 %v68, 0.0
      %v80 = vadd.f32 %v70, 0.0
      %v81 = vadd.f32 %v77, %v78
      %v82 = vadd.f32 %v81, %v79
      %v83 = vadd.f32 %v82, %v80
      %v84 = vadd.f32 %v76, %v83
      %85 = vst [vmem:[#allocation5] sm:$0xff] %v84
    $region17: #{tpu_custom_call.1} parent=1 // pred_fallthru
      _
    %p86 = scmp.ge.s32.totalorder %s71, 0
    // Predicated region
    $region18: #{tpu_custom_call.1} parent=1 // pred_check
      %p87 = pneg %p86
    $region19: #{tpu_custom_call.1} parent=1 // pred_check_branch
      %89 = sbr.rel (%p87) target = $region21
    $region20: #{tpu_custom_call.1} parent=1 // pred_region
      %s90 = smul.u32 %s71, 32
      %s91 = ssub.s32 16, %s90
      %v92 = vlaneseq
      %v93 = vshrl.u32 %v92, 7
      %v94 = vadd.s32 %v93, 8
      %v95 = vadd.s32 %v93, 16
      %v96 = vadd.s32 %v93, 24
      %v97 = vld [vmem:[#allocation5] sm:$0xff]
      %v98 = vstv %s91
      %vm99 = vcmp.lt.s32.totalorder %v93, %v98
      %vm100 = vcmp.lt.s32.totalorder %v94, %v98
      %vm101 = vcmp.lt.s32.totalorder %v95, %v98
      %vm102 = vcmp.lt.s32.totalorder %v96, %v98
      %v103 = vsel %vm99, %v64, 0.0
      %v104 = vsel %vm100, %v66, 0.0
      %v105 = vsel %vm101, %v68, 0.0
      %v106 = vsel %vm102, %v70, 0.0
      %v107 = vadd.f32 %v103, 0.0
      %v108 = vadd.f32 %v104, 0.0
      %v109 = vadd.f32 %v105, 0.0
      %v110 = vadd.f32 %v106, 0.0
      %v111 = vadd.f32 %v107, %v108
      %v112 = vadd.f32 %v111, %v109
      %v113 = vadd.f32 %v112, %v110
      %v114 = vadd.f32 %v97, %v113
      %115 = vst [vmem:[#allocation5] sm:$0xff] %v114
    $region21: #{tpu_custom_call.1} parent=1 // pred_fallthru
      _
    // Predicated region
    $region22: #{tpu_custom_call.1} parent=1 // pred_check
      _
    $region23: #{tpu_custom_call.1} parent=1 // pred_check_branch
      %117 = sbr.rel (0) target = $region25
    $region24: #{tpu_custom_call.1} parent=1 // pred_region
      %119 = vsyncadd [#allocation4], 0
      %s121 = sshll.u32 [#allocation5], 4
      %s122 = int_to_ptr.vmem [resolvable:$true] %s121
      %s123 = sshll.u32 %s1, 4
      %s124 = int_to_ptr.hbm [resolvable:$true] %s123
      %126 = dma.vmem_to_hbm [thread:$0]  %s122, 128, %s124, [#allocation4]
    $region25: #{tpu_custom_call.1} parent=1 // pred_fallthru
      _
    // Predicated region
    $region26: #{tpu_custom_call.1} parent=1 // pred_check
      _
    $region27: #{tpu_custom_call.1} parent=1 // pred_check_branch
      %128 = sbr.rel (0) target = $region29
    $region28: #{tpu_custom_call.1} parent=1 // pred_region
      %130 = dma.done [#allocation4], 128
    $region29: #{tpu_custom_call.1} parent=1 // pred_fallthru
      _
    %131 = vsyncpa [#allocation3], 1
    %132 = vsyncpa [#allocation4], 1

</llo_original>
